<compile_context>
chip_gen: v7x
topology: tpu7x:2x2x1
jax: 0.10.0
libtpu: 0.0.40
codegen_flags: <defaults>
</compile_context>

<pallas_src>
import jax
import jax.numpy as jnp
from jax.experimental import pallas as pl
from jax.experimental.pallas import tpu as pltpu

BN_EPS = 1e-5
_DEFAULT_VMEM_CAPACITY = 64 * 1024 * 1024   # conservative fallback (v7x per-TC VMEM)


# --------------------------------------------------------------------------- #
# Kernel
# --------------------------------------------------------------------------- #
def mlp_kernel(x_ref, w1_ref, gamma_ref, beta_ref, w2_ref, o_ref):
    h_idx = pl.program_id(1)          # trailing (arbitrary) H-tile axis

    @pl.when(h_idx == 0)
    def _():
        o_ref[...] = jnp.zeros_like(o_ref)

    # ---- Linear 1 (bf16 operands on MXU, f32 accumulate): [B, D] @ [D, TILE_H] ----
    # (b1 omitted: a per-feature bias before training-mode BN is cancelled exactly
    #  by the batch-mean subtraction.)
    h = jnp.dot(x_ref[...], w1_ref[...], preferred_element_type=jnp.float32)

    # ---- BatchNorm1d (training mode): per-feature batch mean / biased variance ----
    mean = jnp.mean(h, axis=0, keepdims=True)                    # [1, TILE_H]
    centered = h - mean
    var = jnp.mean(centered * centered, axis=0, keepdims=True)   # biased (/N)
    scale = jax.lax.rsqrt(var + BN_EPS) * gamma_ref[...]         # fold gamma into 1/std

    # ---- affine + ReLU ----
    h_act = jnp.maximum(centered * scale + beta_ref[...], 0.0)

    # ---- Linear 2 partial product, accumulated into the resident f32 output block ----
    o_ref[...] += jnp.dot(h_act.astype(jnp.bfloat16), w2_ref[...],
                          preferred_element_type=jnp.float32)


# --------------------------------------------------------------------------- #
# VMEM budgeting
# --------------------------------------------------------------------------- #
def _vmem_capacity_bytes():
    """Per-core VMEM capacity (generation-aware, with a safe fallback)."""
    try:
        info = pltpu.get_tpu_info()
        cap = int(getattr(info, "vmem_capacity_bytes", 0) or 0)
        if cap > 0:
            return cap
    except Exception:
        pass
    return _DEFAULT_VMEM_CAPACITY


def _vmem_estimate_bytes(B, D, tile_h, P):
    """VMEM footprint for one grid step.

    x and the output block have constant index_maps -> fetched once (single copy);
    streamed weight/BN tiles are double-buffered; the f32 intermediates
    (h, centered, h_act) each occupy a B x TILE_H slab.
    """
    bf16, f32 = 2, 4
    resident = B * D * bf16 + B * P * f32
    streamed = 2 * (D * tile_h * bf16 + tile_h * P * bf16 + 2 * tile_h * f32)
    temps = 3 * B * tile_h * f32
    return resident + streamed + temps


def _choose_tile_h(B, D, H, P, budget_bytes):
    """Largest H tile that divides H, is lane-aligned, and fits the VMEM budget."""
    for t in range(H, 0, -1):
        if H % t:
            continue
        if t % 128 and t != H:
            continue
        if _vmem_estimate_bytes(B, D, t, P) <= budget_bytes:
            return t
    # TODO(synk): two-pass BN (accumulate sum/sumsq over batch tiles, then
    # normalize + Linear2) for batches too large to keep x / h resident.
    raise ValueError(
        f"no H tile of hidden={H} fits the VMEM budget ({budget_bytes} B) "
        f"for batch={B}, dim={D}, projection={P}"
    )


# --------------------------------------------------------------------------- #
# Wrapper
# --------------------------------------------------------------------------- #
def mlp_forward(x, w1, gamma, beta, w2, b2, *, tile_h=None, core_splits=None):
    B, D = x.shape
    D2, H = w1.shape
    H2, P = w2.shape
    assert (D2, H2) == (D, H), "weight shapes must be [D, H] and [H, P]"
    assert w1.dtype == jnp.bfloat16 and w2.dtype == jnp.bfloat16, (
        "store w1/w2 persistently in bf16 (a per-call f32->bf16 cast triples "
        "weight HBM traffic)")

    capacity = _vmem_capacity_bytes()
    budget = int(capacity * 0.70)        # headroom for pipeline bookkeeping/semaphores
    vmem_limit = int(capacity * 0.85)

    if tile_h is None:
        tile_h = _choose_tile_h(B, D, H, P, budget)
    if H % tile_h:
        raise ValueError("hidden size must be divisible by tile_h")
    est = _vmem_estimate_bytes(B, D, tile_h, P)
    if est > vmem_limit:
        raise ValueError(
            f"tile_h={tile_h} needs ~{est} B of VMEM, above the limit {vmem_limit} B")

    num_h = H // tile_h
    if core_splits is None:
        # 2-way split keeps both v7x TensorCores busy; no-op cost on 1-TC parts.
        core_splits = 2 if (num_h >= 2 and num_h % 2 == 0) else 1
    if num_h % core_splits:
        raise ValueError("number of H tiles must divide evenly across core splits")
    hpc = num_h // core_splits           # H tiles handled per core slice

    # x cast only if it arrives as f32; weights are already bf16.
    xb = x if x.dtype == jnp.bfloat16 else x.astype(jnp.bfloat16)

    grid_spec = pltpu.PrefetchScalarGridSpec(
        num_scalar_prefetch=0,
        grid=(core_splits, hpc),
        in_specs=[
            pl.BlockSpec((B, D), lambda c, h: (0, 0)),                  # x (resident)
            pl.BlockSpec((D, tile_h), lambda c, h: (0, c * hpc + h)),   # w1 tile
            pl.BlockSpec((1, tile_h), lambda c, h: (0, c * hpc + h)),   # gamma
            pl.BlockSpec((1, tile_h), lambda c, h: (0, c * hpc + h)),   # beta
            pl.BlockSpec((tile_h, P), lambda c, h: (c * hpc + h, 0)),   # w2 tile
        ],
        # One resident (B, P) f32 accumulator block per core slice.
        out_specs=pl.BlockSpec((None, B, P), lambda c, h: (c, 0, 0)),
    )

    partials = pl.pallas_call(
        mlp_kernel,
        out_shape=jax.ShapeDtypeStruct((core_splits, B, P), jnp.float32),
        grid_spec=grid_spec,
        compiler_params=pltpu.CompilerParams(
            dimension_semantics=("parallel", "arbitrary"),
            vmem_limit_bytes=vmem_limit,
        ),
    )(xb, w1, gamma, beta, w2)

    # Tiny (B, P) reduce over per-core partial sums + Linear2 bias.
    return jnp.sum(partials, axis=0) + b2


# --------------------------------------------------------------------------- #
# Parameters & reference
# --------------------------------------------------------------------------- #
def init_params(key, dim, hidden, projection):
    """Deterministic synthetic parameters; matmul weights stored persistently in bf16."""
    k1, k2, k3, k4 = jax.random.split(key, 4)
    lim1 = 1.0 / (dim ** 0.5)
    w1 = jax.random.uniform(k1, (dim, hidden), jnp.float32, -lim1, lim1).astype(jnp.bfloat16)
    b1 = jax.random.uniform(k2, (1, hidden), jnp.float32, -lim1, lim1)
    lim2 = 1.0 / (hidden ** 0.5)
    w2 = jax.random.uniform(k3, (hidden, projection), jnp.float32, -lim2, lim2).astype(jnp.bfloat16)
    b2 = jax.random.uniform(k4, (1, projection), jnp.float32, -lim2, lim2)
    gamma = jnp.ones((1, hidden), jnp.float32)   # BatchNorm1d default init
    beta = jnp.zeros((1, hidden), jnp.float32)
    return w1, b1, gamma, beta, w2, b2


def mlp_reference(x, w1, b1, gamma, beta, w2, b2):
    """Pure-JAX reference (bf16 operands / f32 accumulate, keeps b1 to check cancellation)."""
    h = jnp.dot(x.astype(jnp.bfloat16), w1.astype(jnp.bfloat16),
                preferred_element_type=jnp.float32) + b1
    mu = h.mean(0, keepdims=True)
    var = ((h - mu) ** 2).mean(0, keepdims=True)
    h = (h - mu) * jax.lax.rsqrt(var + BN_EPS) * gamma + beta
    h = jnp.maximum(h, 0.0)
    return jnp.dot(h.astype(jnp.bfloat16), w2.astype(jnp.bfloat16),
                   preferred_element_type=jnp.float32) + b2


if __name__ == "__main__":
    # Small but lane-dense shapes (last dims multiples of 128, batch >= 8 sublanes).
    batch, dim, hidden, projection = 8, 128, 512, 128

    key = jax.random.PRNGKey(0)
    kx, kp = jax.random.split(key)
    x = jax.random.normal(kx, (batch, dim), jnp.float32)
    w1, b1, gamma, beta, w2, b2 = init_params(kp, dim, hidden, projection)

    # tile_h=128 -> 4 H tiles split 2 ways over the "core" axis (grid (2, 2)),
    # exercising both the per-core H accumulation and the cross-core reduce.
    out = mlp_forward(x, w1, gamma, beta, w2, b2, tile_h=128)
    jax.block_until_ready(out)

    ref = mlp_reference(x, w1, b1, gamma, beta, w2, b2)

    assert out.shape == (batch, projection)
    assert jnp.allclose(out, ref, atol=2e-2, rtol=2e-2), (
        float(jnp.max(jnp.abs(out - ref)))
    )
    print("KERNEL_OK")
</pallas_src>

<mosaic_0001>
module attributes {stable_mosaic.version = 11 : i64} {
  func.func @mlp_kernel(%arg0: i32, %arg1: i32, %arg2: memref<8x128xbf16, #tpu.memory_space<vmem>>, %arg3: memref<128x128xbf16, #tpu.memory_space<vmem>>, %arg4: memref<1x128xf32, #tpu.memory_space<vmem>>, %arg5: memref<1x128xf32, #tpu.memory_space<vmem>>, %arg6: memref<128x128xbf16, #tpu.memory_space<vmem>>, %arg7: memref<1x8x128xf32, #tpu.memory_space<vmem>>) attributes {dimension_semantics = [#tpu.dimension_semantics<parallel>, #tpu.dimension_semantics<arbitrary>], iteration_bounds = array<i64: 2, 2>, scalar_prefetch = 0 : i64, scratch_operands = 0 : i64, tpu.core_type = #tpu.core_type<tc>, window_params = [{pipeline_mode = #tpu.pipeline_mode<synchronous>, transform_indices = @transform_0, window_bounds = array<i64: 8, 128>}, {transform_indices = @transform_1, window_bounds = array<i64: 128, 128>}, {transform_indices = @transform_2, window_bounds = array<i64: 1, 128>}, {transform_indices = @transform_3, window_bounds = array<i64: 1, 128>}, {transform_indices = @transform_4, window_bounds = array<i64: 128, 128>}, {transform_indices = @transform_5, window_bounds = array<i64: 1, 8, 128>}]} {
    %c0_i32 = arith.constant 0 : i32
    %0 = arith.cmpi eq, %arg1, %c0_i32 : i32
    %1 = arith.extui %0 : i1 to i32
    %c0_i32_0 = arith.constant 0 : i32
    %2 = arith.cmpi ne, %1, %c0_i32_0 : i32
    scf.if %2 {
      %cst_23 = arith.constant 0.000000e+00 : f32
      %38 = vector.broadcast %cst_23 : f32 to vector<8x128xf32>
      %c0_24 = arith.constant 0 : index
      %c0_25 = arith.constant 0 : index
      %c0_26 = arith.constant 0 : index
      %39 = vector.load %arg7[%c0_24, %c0_25, %c0_26] : memref<1x8x128xf32, #tpu.memory_space<vmem>>, vector<1x8x128xf32>
      %40 = vector.shape_cast %39 : vector<1x8x128xf32> to vector<8x128xf32>
      %41 = vector.shape_cast %38 : vector<8x128xf32> to vector<1x8x128xf32>
      tpu.vector_store %arg7[%c0_24, %c0_25, %c0_26], %41 {strides = array<i32>} : memref<1x8x128xf32, #tpu.memory_space<vmem>>, vector<1x8x128xf32>,
    } else {
    }
    %c0 = arith.constant 0 : index
    %c0_1 = arith.constant 0 : index
    %3 = vector.load %arg2[%c0, %c0_1] : memref<8x128xbf16, #tpu.memory_space<vmem>>, vector<8x128xbf16>
    %c0_2 = arith.constant 0 : index
    %c0_3 = arith.constant 0 : index
    %4 = vector.load %arg3[%c0_2, %c0_3] : memref<128x128xbf16, #tpu.memory_space<vmem>>, vector<128x128xbf16>
    %cst = arith.constant dense<0.000000e+00> : vector<8x128xf32>
    %5 = tpu.matmul %3, %4, %cst {dimension_numbers = #tpu.dot_dimension_numbers<[1], [0], [0], [1], [0, 0, 1, 1], [], []>} : vector<8x128xbf16>, vector<128x128xbf16>, vector<8x128xf32> -> vector<8x128xf32>
    %cst_4 = arith.constant dense<0.000000e+00> : vector<128xf32>
    %6 = vector.multi_reduction <add>, %5, %cst_4 [0] : vector<8x128xf32> to vector<128xf32>
    %7 = vector.shape_cast %6 : vector<128xf32> to vector<1x128xf32>
    %cst_5 = arith.constant 8.000000e+00 : f32
    %8 = vector.broadcast %cst_5 : f32 to vector<1x128xf32>
    %9 = arith.divf %7, %8 : vector<1x128xf32>
    %10 = vector.broadcast %9 : vector<1x128xf32> to vector<8x128xf32>
    %11 = arith.subf %5, %10 : vector<8x128xf32>
    %12 = arith.mulf %11, %11 : vector<8x128xf32>
    %cst_6 = arith.constant dense<0.000000e+00> : vector<128xf32>
    %13 = vector.multi_reduction <add>, %12, %cst_6 [0] : vector<8x128xf32> to vector<128xf32>
    %14 = vector.shape_cast %13 : vector<128xf32> to vector<1x128xf32>
    %cst_7 = arith.constant 8.000000e+00 : f32
    %15 = vector.broadcast %cst_7 : f32 to vector<1x128xf32>
    %16 = arith.divf %14, %15 : vector<1x128xf32>
    %cst_8 = arith.constant 9.99999974E-6 : f32
    %17 = vector.broadcast %cst_8 : f32 to vector<1x128xf32>
    %18 = arith.addf %16, %17 : vector<1x128xf32>
    %19 = math.rsqrt %18 : vector<1x128xf32>
    %c0_9 = arith.constant 0 : index
    %c0_10 = arith.constant 0 : index
    %20 = vector.load %arg4[%c0_9, %c0_10] : memref<1x128xf32, #tpu.memory_space<vmem>>, vector<1x128xf32>
    %21 = arith.mulf %19, %20 : vector<1x128xf32>
    %22 = vector.broadcast %21 : vector<1x128xf32> to vector<8x128xf32>
    %23 = arith.mulf %11, %22 : vector<8x128xf32>
    %c0_11 = arith.constant 0 : index
    %c0_12 = arith.constant 0 : index
    %24 = vector.load %arg5[%c0_11, %c0_12] : memref<1x128xf32, #tpu.memory_space<vmem>>, vector<1x128xf32>
    %25 = vector.broadcast %24 : vector<1x128xf32> to vector<8x128xf32>
    %26 = arith.addf %23, %25 : vector<8x128xf32>
    %cst_13 = arith.constant 0.000000e+00 : f32
    %27 = vector.broadcast %cst_13 : f32 to vector<8x128xf32>
    %28 = arith.maximumf %26, %27 : vector<8x128xf32>
    %c0_14 = arith.constant 0 : index
    %c0_15 = arith.constant 0 : index
    %c0_16 = arith.constant 0 : index
    %29 = vector.load %arg7[%c0_14, %c0_15, %c0_16] : memref<1x8x128xf32, #tpu.memory_space<vmem>>, vector<1x8x128xf32>
    %30 = vector.shape_cast %29 : vector<1x8x128xf32> to vector<8x128xf32>
    %31 = arith.truncf %28 : vector<8x128xf32> to vector<8x128xbf16>
    %c0_17 = arith.constant 0 : index
    %c0_18 = arith.constant 0 : index
    %32 = vector.load %arg6[%c0_17, %c0_18] : memref<128x128xbf16, #tpu.memory_space<vmem>>, vector<128x128xbf16>
    %cst_19 = arith.constant dense<0.000000e+00> : vector<8x128xf32>
    %33 = tpu.matmul %31, %32, %cst_19 {dimension_numbers = #tpu.dot_dimension_numbers<[1], [0], [0], [1], [0, 0, 1, 1], [], []>} : vector<8x128xbf16>, vector<128x128xbf16>, vector<8x128xf32> -> vector<8x128xf32>
    %34 = arith.addf %30, %33 : vector<8x128xf32>
    %c0_20 = arith.constant 0 : index
    %c0_21 = arith.constant 0 : index
    %c0_22 = arith.constant 0 : index
    %35 = vector.load %arg7[%c0_20, %c0_21, %c0_22] : memref<1x8x128xf32, #tpu.memory_space<vmem>>, vector<1x8x128xf32>
    %36 = vector.shape_cast %35 : vector<1x8x128xf32> to vector<8x128xf32>
    %37 = vector.shape_cast %34 : vector<8x128xf32> to vector<1x8x128xf32>
    tpu.vector_store %arg7[%c0_20, %c0_21, %c0_22], %37 {strides = array<i32>} : memref<1x8x128xf32, #tpu.memory_space<vmem>>, vector<1x8x128xf32>,
    return
  }
  func.func @transform_0(%arg0: i32, %arg1: i32) -> (i32, i32) {
    %c0_i32 = arith.constant 0 : i32
    %c0_i32_0 = arith.constant 0 : i32
    %c0_i32_1 = arith.constant 0 : i32
    return %c0_i32, %c0_i32_0 : i32, i32
  }
  func.func @transform_1(%arg0: i32, %arg1: i32) -> (i32, i32) {
    %c2_i32 = arith.constant 2 : i32
    %0 = arith.muli %arg0, %c2_i32 : i32
    %1 = arith.addi %0, %arg1 : i32
    %c0_i32 = arith.constant 0 : i32
    %c0_i32_0 = arith.constant 0 : i32
    return %c0_i32, %1 : i32, i32
  }
  func.func @transform_2(%arg0: i32, %arg1: i32) -> (i32, i32) {
    %c2_i32 = arith.constant 2 : i32
    %0 = arith.muli %arg0, %c2_i32 : i32
    %1 = arith.addi %0, %arg1 : i32
    %c0_i32 = arith.constant 0 : i32
    %c0_i32_0 = arith.constant 0 : i32
    return %c0_i32, %1 : i32, i32
  }
  func.func @transform_3(%arg0: i32, %arg1: i32) -> (i32, i32) {
    %c2_i32 = arith.constant 2 : i32
    %0 = arith.muli %arg0, %c2_i32 : i32
    %1 = arith.addi %0, %arg1 : i32
    %c0_i32 = arith.constant 0 : i32
    %c0_i32_0 = arith.constant 0 : i32
    return %c0_i32, %1 : i32, i32
  }
  func.func @transform_4(%arg0: i32, %arg1: i32) -> (i32, i32) {
    %c2_i32 = arith.constant 2 : i32
    %0 = arith.muli %arg0, %c2_i32 : i32
    %1 = arith.addi %0, %arg1 : i32
    %c0_i32 = arith.constant 0 : i32
    %c0_i32_0 = arith.constant 0 : i32
    return %1, %c0_i32 : i32, i32
  }
  func.func @transform_5(%arg0: i32, %arg1: i32) -> (i32, i32, i32) {
    %c0_i32 = arith.constant 0 : i32
    %c0_i32_0 = arith.constant 0 : i32
    %c0_i32_1 = arith.constant 0 : i32
    return %arg0, %c0_i32, %c0_i32_0 : i32, i32, i32
  }
}

</mosaic_0001>

<llo_original>
// kernel: tpu_custom_call.1
$region0: #{tpu_custom_call.1}
  #allocation0 [shape = 'u32[]', space=smem, size = 0x4, offset = 0x4, fixed_abs, tag = 'smem constant byte address 0x4 - core index']
  #allocation1 [shape = 'u32[144,128]{1,0:T(1,128)}', space=vmem, size = 0x12000, scoped, tag = 'internal scratch']
  %s0 = inlined_call_operand.hbm [shape: bf16[8,128], index: 0, kind: input, shape index: {}]
  %s1 = inlined_call_operand.hbm [shape: bf16[128,512], index: 1, kind: input, shape index: {}]
  %s2 = inlined_call_operand.vmem [shape: f32[1,512], index: 2, kind: input, shape index: {}]
  %s3 = inlined_call_operand.vmem [shape: f32[1,512], index: 3, kind: input, shape index: {}]
  %s4 = inlined_call_operand.hbm [shape: bf16[512,128], index: 4, kind: input, shape index: {}]
  %s5 = inlined_call_operand.hbm [shape: f32[2,8,128], index: 5, kind: output, shape index: {}]
  %s6 = sld [smem:[#allocation0]]
  $region69: #{tpu_custom_call.1} parent=0
    _
  %s8 = ssub.s32 1, %s6
  %s9 = scalar_select 0, %s8, %s6
  $region1: #{tpu_custom_call.1} parent=0
    #allocation2 [shape = 'u8[2048]{0}', space=vmem, size = 0x800, scoped, tag = 'input window, operand 0, single buffered']
    #allocation3 [shape = 's32[2]{0}', space=sflag, size = 0x8, scoped, tag = 'scoped memory for tpu_custom_call.1']
    #allocation4 [shape = 's32[2]{0}', space=sflag, size = 0x8, scoped, tag = 'scoped memory for tpu_custom_call.1']
    #allocation5 [shape = 'u8[65536]{0}', space=vmem, size = 0x10000, scoped, tag = 'input window, operand 1']
    #allocation6 [shape = 's32[2]{0}', space=sflag, size = 0x8, scoped, tag = 'scoped memory for tpu_custom_call.1']
    #allocation7 [shape = 'u8[65536]{0}', space=vmem, size = 0x10000, scoped, tag = 'input window, operand 4']
    #allocation8 [shape = 'u8[8192]{0}', space=vmem, size = 0x2000, scoped, tag = 'output window, operand 0']
    %10 = vsyncpa [#allocation3], 0
    %11 = vsyncpa [#allocation6], 0
    %s12 = scalar_lea.sflag [#allocation6], 1
    %13 = vsyncpa %s12, 0
    %14 = vsyncpa [#allocation4], 0
    %s15 = scalar_lea.sflag [#allocation4], 1
    %16 = vsyncpa %s15, 0
    loop: start=0, step=1, limit=6
    $region2: #{tpu_custom_call.1} parent=1 // loop_pre_header
      _
    $region3: #{tpu_custom_call.1} parent=1 // loop_header
      %s18 = sphi 0, %s22
      %p19 = scmp.ge.s32.totalorder %s18, 6
      %s25 = sphi 0, %s37
      %s26 = sphi 0, %s33
      %s27 = sphi 0, %s25
      %s28 = sphi 0, %s26
      %s29 = sphi 0, %s27
      %s30 = sphi 0, %s28
      %s38 = sphi 0, %s38
      %s40 = sphi 0, %s38
      %s41 = sphi 0, %s40
      %s55 = sphi 0, %s41
      %s65 = sphi 0, %s67
      %s68 = sphi 0, %s65
      %s69 = sphi 0, %s68
      %s85 = sphi 0, %s69
      %s95 = sphi 0, %s97
      %s98 = sphi 0, %s95
      %s99 = sphi 0, %s98
      %s115 = sphi 0, %s99
      %s125 = sphi 0, %s127
      %s128 = sphi 0, %s125
      %s129 = sphi 0, %s128
      %s145 = sphi 0, %s129
      %s155 = sphi 0, %s157
      %s158 = sphi 0, %s155
      %s159 = sphi 0, %s158
      %s175 = sphi 0, %s159
      %s181 = sphi 0, %s183
      %s184 = sphi 0, %s181
      %s185 = sphi 0, %s184
      %s201 = sphi 0, %s185
    $region4: #{tpu_custom_call.1} parent=1 // loop_header_branch
      %21 = sbr.rel (%p19) target = $region8
    $region5: #{tpu_custom_call.1} parent=1 // loop_body
      %s23 = ssub.s32 %s18, 1
      %s24 = ssub.s32 %s18, 2
      %s31 = sadd.s32 1, %s26
      %p32 = scmp.ge.s32.totalorder %s31, 2
      %s33 = scalar_select %p32, 0, %s31
      %s34 = sadd.s32 1, %s25
      %s35 = scalar_select %p32, %s34, %s25
      %p36 = scmp.ge.s32.totalorder %s35, 2
      %s37 = scalar_select %p36, 0, %s35
      %s39 = sadd.s32 %s38, 1
      %p42 = scmp.eq.s32.totalorder %s18, 3
      %p43 = scmp.ne.s32.totalorder %s38, %s40
      %p44 = scmp.eq.s32.totalorder %s18, 0
      %p45 = por %p43, %p44
      %p46 = scmp.ne.s32.totalorder %s38, %s40
      %p47 = scmp.eq.s32.totalorder %s23, 3
      %p48 = por %p46, %p47
      %p49 = scmp.ne.s32.totalorder %s40, %s41
      %p50 = scmp.eq.s32.totalorder %s23, 0
      %p51 = por %p49, %p50
      %p52 = scmp.ne.s32.totalorder %s40, %s41
      %p53 = scmp.eq.s32.totalorder %s24, 3
      %p54 = por %p52, %p53
      %p56 = scmp.ne.s32.totalorder %s41, %s55
      %p57 = scmp.eq.s32.totalorder %s24, 0
      %p58 = por %p56, %p57
      %s59 = smul.u32 %s25, 2
      %s60 = sadd.s32 %s59, %s26
      %s61 = smul.u32 %s37, 2
      %s62 = sadd.s32 %s61, %s33
      %s63 = ssub.s32 %s60, %s62
      %p64 = scmp.eq.s32.totalorder %s63, 0
      %s66 = sadd.s32 %s65, 1
      %s67 = scalar_select %p64, %s65, %s66
      %p70 = pneg %p64
      %p71 = scmp.eq.s32.totalorder %s18, 3
      %p72 = por %p70, %p71
      %p73 = scmp.ne.s32.totalorder %s65, %s68
      %p74 = scmp.eq.s32.totalorder %s18, 0
      %p75 = por %p73, %p74
      %p76 = scmp.ne.s32.totalorder %s65, %s68
      %p77 = scmp.eq.s32.totalorder %s23, 3
      %p78 = por %p76, %p77
      %p79 = scmp.ne.s32.totalorder %s68, %s69
      %p80 = scmp.eq.s32.totalorder %s23, 0
      %p81 = por %p79, %p80
      %p82 = scmp.ne.s32.totalorder %s68, %s69
      %p83 = scmp.eq.s32.totalorder %s24, 3
      %p84 = por %p82, %p83
      %p86 = scmp.ne.s32.totalorder %s69, %s85
      %p87 = scmp.eq.s32.totalorder %s24, 0
      %p88 = por %p86, %p87
      %s89 = smul.u32 %s25, 2
      %s90 = sadd.s32 %s89, %s26
      %s91 = smul.u32 %s37, 2
      %s92 = sadd.s32 %s91, %s33
      %s93 = ssub.s32 %s90, %s92
      %p94 = scmp.eq.s32.totalorder %s93, 0
      %s96 = sadd.s32 %s95, 1
      %s97 = scalar_select %p94, %s95, %s96
      %p100 = pneg %p94
      %p101 = scmp.eq.s32.totalorder %s18, 3
      %p102 = por %p100, %p101
      %p103 = scmp.ne.s32.totalorder %s95, %s98
      %p104 = scmp.eq.s32.totalorder %s18, 0
      %p105 = por %p103, %p104
      %p106 = scmp.ne.s32.totalorder %s95, %s98
      %p107 = scmp.eq.s32.totalorder %s23, 3
      %p108 = por %p106, %p107
      %p109 = scmp.ne.s32.totalorder %s98, %s99
      %p110 = scmp.eq.s32.totalorder %s23, 0
      %p111 = por %p109, %p110
      %p112 = scmp.ne.s32.totalorder %s98, %s99
      %p113 = scmp.eq.s32.totalorder %s24, 3
      %p114 = por %p112, %p113
      %p116 = scmp.ne.s32.totalorder %s99, %s115
      %p117 = scmp.eq.s32.totalorder %s24, 0
      %p118 = por %p116, %p117
      %s119 = smul.u32 %s25, 2
      %s120 = sadd.s32 %s119, %s26
      %s121 = smul.u32 %s37, 2
      %s122 = sadd.s32 %s121, %s33
      %s123 = ssub.s32 %s120, %s122
      %p124 = scmp.eq.s32.totalorder %s123, 0
      %s126 = sadd.s32 %s125, 1
      %s127 = scalar_select %p124, %s125, %s126
      %p130 = pneg %p124
      %p131 = scmp.eq.s32.totalorder %s18, 3
      %p132 = por %p130, %p131
      %p133 = scmp.ne.s32.totalorder %s125, %s128
      %p134 = scmp.eq.s32.totalorder %s18, 0
      %p135 = por %p133, %p134
      %p136 = scmp.ne.s32.totalorder %s125, %s128
      %p137 = scmp.eq.s32.totalorder %s23, 3
      %p138 = por %p136, %p137
      %p139 = scmp.ne.s32.totalorder %s128, %s129
      %p140 = scmp.eq.s32.totalorder %s23, 0
      %p141 = por %p139, %p140
      %p142 = scmp.ne.s32.totalorder %s128, %s129
      %p143 = scmp.eq.s32.totalorder %s24, 3
      %p144 = por %p142, %p143
      %p146 = scmp.ne.s32.totalorder %s129, %s145
      %p147 = scmp.eq.s32.totalorder %s24, 0
      %p148 = por %p146, %p147
      %s149 = smul.u32 %s25, 2
      %s150 = sadd.s32 %s149, %s26
      %s151 = smul.u32 %s37, 2
      %s152 = sadd.s32 %s151, %s33
      %s153 = ssub.s32 %s150, %s152
      %p154 = scmp.eq.s32.totalorder %s153, 0
      %s156 = sadd.s32 %s155, 1
      %s157 = scalar_select %p154, %s155, %s156
      %p160 = pneg %p154
      %p161 = scmp.eq.s32.totalorder %s18, 3
      %p162 = por %p160, %p161
      %p163 = scmp.ne.s32.totalorder %s155, %s158
      %p164 = scmp.eq.s32.totalorder %s18, 0
      %p165 = por %p163, %p164
      %p166 = scmp.ne.s32.totalorder %s155, %s158
      %p167 = scmp.eq.s32.totalorder %s23, 3
      %p168 = por %p166, %p167
      %p169 = scmp.ne.s32.totalorder %s158, %s159
      %p170 = scmp.eq.s32.totalorder %s23, 0
      %p171 = por %p169, %p170
      %p172 = scmp.ne.s32.totalorder %s158, %s159
      %p173 = scmp.eq.s32.totalorder %s24, 3
      %p174 = por %p172, %p173
      %p176 = scmp.ne.s32.totalorder %s159, %s175
      %p177 = scmp.eq.s32.totalorder %s24, 0
      %p178 = por %p176, %p177
      %s179 = ssub.s32 %s25, %s37
      %p180 = scmp.eq.s32.totalorder %s179, 0
      %s182 = sadd.s32 %s181, 1
      %s183 = scalar_select %p180, %s181, %s182
      %p186 = pneg %p180
      %p187 = scmp.eq.s32.totalorder %s18, 3
      %p188 = por %p186, %p187
      %p189 = scmp.ne.s32.totalorder %s181, %s184
      %p190 = scmp.eq.s32.totalorder %s18, 0
      %p191 = por %p189, %p190
      %p192 = scmp.ne.s32.totalorder %s181, %s184
      %p193 = scmp.eq.s32.totalorder %s23, 3
      %p194 = por %p192, %p193
      %p195 = scmp.ne.s32.totalorder %s184, %s185
      %p196 = scmp.eq.s32.totalorder %s23, 0
      %p197 = por %p195, %p196
      %p198 = scmp.ne.s32.totalorder %s184, %s185
      %p199 = scmp.eq.s32.totalorder %s24, 3
      %p200 = por %p198, %p199
      %p202 = scmp.ne.s32.totalorder %s185, %s201
      %p203 = scmp.eq.s32.totalorder %s24, 0
      %p204 = por %p202, %p203
      %p205 = scmp.le.s32.totalorder 1, %s18
      %p206 = scmp.lt.s32.totalorder %s18, 5
      %p207 = pnand %p205, %p206
      %p208 = pneg %p207
      // Predicated region
      $region9: #{tpu_custom_call.1} parent=5 // pred_check
        _
      $region10: #{tpu_custom_call.1} parent=5 // pred_check_branch
        %210 = sbr.rel (%p207) target = $region12
      $region11: #{tpu_custom_call.1} parent=5 // pred_region
        %s211 = ssub.s32 %s18, 1
        // Predicated region
        $region13: #{tpu_custom_call.1} parent=11 // pred_check
          %p212 = pneg %p51
        $region14: #{tpu_custom_call.1} parent=11 // pred_check_branch
          %214 = sbr.rel (%p212) target = $region16
        $region15: #{tpu_custom_call.1} parent=11 // pred_region
          %s216 = ssub.s32 64, 64
          %217 = vsyncadd [#allocation3], %s216
          %s219 = sshll.u32 [#allocation2], 4
          %s220 = int_to_ptr.vmem [resolvable:$true] %s219
          %222 = dma.hbm_to_vmem [thread:$0]  %s0, 64, %s220, [#allocation3]
        $region16: #{tpu_custom_call.1} parent=11 // pred_fallthru
          _
      $region12: #{tpu_custom_call.1} parent=5 // pred_fallthru
        _
      %p223 = scmp.lt.s32.totalorder %s18, 4
      // Predicated region
      $region17: #{tpu_custom_call.1} parent=5 // pred_check
        %p224 = pneg %p223
      $region18: #{tpu_custom_call.1} parent=5 // pred_check_branch
        %226 = sbr.rel (%p224) target = $region20
      $region19: #{tpu_custom_call.1} parent=5 // pred_region
        // Predicated region
        $region21: #{tpu_custom_call.1} parent=19 // pred_check
          %p227 = pneg %p75
        $region22: #{tpu_custom_call.1} parent=19 // pred_check_branch
          %229 = sbr.rel (%p227) target = $region24
        $region23: #{tpu_custom_call.1} parent=19 // pred_region
          %s230 = sand.u32 %s18, 1
          %s231 = scalar_lea.sflag [#allocation6], %s230
          %s232 = sand.u32 %s65, 1
          %s233 = smul.addr %s232, 64
          %s234 = scalar_lea.vmem [#allocation5], %s233
          %s235 = smul.u32 %s25, 2
          %s236 = sadd.s32 %s235, %s26
          %s238 = ssub.s32 1024, 1024
          %239 = vsyncadd %s231, %s238
          %s240 = smul.addr %s236, 64
          %s241 = scalar_lea.hbm %s1, %s240
          %s242 = sshll.u32 %s234, 4
          %s243 = int_to_ptr.vmem [resolvable:$true] %s242
          %248 = dma.hbm_to_vmem [thread:$0]  %s241, 1024, %s243, %s231, 256, 64, 4
        $region24: #{tpu_custom_call.1} parent=19 // pred_fallthru
          _
        // Predicated region
        $region25: #{tpu_custom_call.1} parent=19 // pred_check
          %p249 = pneg %p105
        $region26: #{tpu_custom_call.1} parent=19 // pred_check_branch
          %251 = sbr.rel (%p249) target = $region28
        $region27: #{tpu_custom_call.1} parent=19 // pred_region
          %s252 = smul.u32 %s25, 2
          %s253 = sadd.s32 %s252, %s26
          %p254 = scmp.lt.s32.totalorder %s253, 3
          %s255 = scalar_select %p254, %s253, 3
          %s256 = scalar_lea.vmem %s2, %s255
          %s257 = smul.u32 %s25, 2
          %s258 = sadd.s32 %s257, %s26
        $region28: #{tpu_custom_call.1} parent=19 // pred_fallthru
          _
        // Predicated region
        $region29: #{tpu_custom_call.1} parent=19 // pred_check
          %p259 = pneg %p135
        $region30: #{tpu_custom_call.1} parent=19 // pred_check_branch
          %261 = sbr.rel (%p259) target = $region32
        $region31: #{tpu_custom_call.1} parent=19 // pred_region
          %s262 = smul.u32 %s25, 2
          %s263 = sadd.s32 %s262, %s26
          %p264 = scmp.lt.s32.totalorder %s263, 3
          %s265 = scalar_select %p264, %s263, 3
          %s266 = scalar_lea.vmem %s3, %s265
          %s267 = smul.u32 %s25, 2
          %s268 = sadd.s32 %s267, %s26
        $region32: #{tpu_custom_call.1} parent=19 // pred_fallthru
          _
        // Predicated region
        $region33: #{tpu_custom_call.1} parent=19 // pred_check
          %p269 = pneg %p165
        $region34: #{tpu_custom_call.1} parent=19 // pred_check_branch
          %271 = sbr.rel (%p269) target = $region36
        $region35: #{tpu_custom_call.1} parent=19 // pred_region
          %s272 = sand.u32 %s18, 1
          %s273 = scalar_lea.sflag [#allocation6], %s272
          %s274 = sand.u32 %s155, 1
          %s275 = smul.addr %s274, 64
          %s276 = scalar_lea.vmem [#allocation7], %s275
          %s277 = smul.u32 %s25, 2
          %s278 = sadd.s32 %s277, %s26
          %s279 = smul.u32 16, %s278
          %s281 = ssub.s32 1024, 1024
          %282 = vsyncadd %s273, %s281
          %s283 = smul.addr %s279, 64
          %s284 = scalar_lea.hbm %s4, %s283
          %s285 = sshll.u32 %s276, 4
          %s286 = int_to_ptr.vmem [resolvable:$true] %s285
          %291 = dma.hbm_to_vmem [thread:$0]  %s284, 1024, %s286, %s273, 64, 64, 4
        $region36: #{tpu_custom_call.1} parent=19 // pred_fallthru
          _
      $region20: #{tpu_custom_call.1} parent=5 // pred_fallthru
        _
      %p292 = scmp.le.s32.totalorder 1, %s18
      %p293 = scmp.lt.s32.totalorder %s18, 5
      %p294 = pnand %p292, %p293
      %p295 = pneg %p294
      // Predicated region
      $region37: #{tpu_custom_call.1} parent=5 // pred_check
        _
      $region38: #{tpu_custom_call.1} parent=5 // pred_check_branch
        %297 = sbr.rel (%p294) target = $region40
      $region39: #{tpu_custom_call.1} parent=5 // pred_region
        %s298 = ssub.s32 %s18, 1
        // Predicated region
        $region41: #{tpu_custom_call.1} parent=39 // pred_check
          %p299 = pneg %p51
        $region42: #{tpu_custom_call.1} parent=39 // pred_check_branch
          %301 = sbr.rel (%p299) target = $region44
        $region43: #{tpu_custom_call.1} parent=39 // pred_region
          %302 = dma.done [#allocation3], 64
        $region44: #{tpu_custom_call.1} parent=39 // pred_fallthru
          _
        %s303 = sand.u32 %s23, 1
        %s304 = scalar_lea.sflag [#allocation6], %s303
        %s305 = sand.u32 %s68, 1
        %s306 = smul.addr %s305, 64
        %s307 = scalar_lea.vmem [#allocation5], %s306
        // Predicated region
        $region45: #{tpu_custom_call.1} parent=39 // pred_check
          %p308 = pneg %p81
        $region46: #{tpu_custom_call.1} parent=39 // pred_check_branch
          %310 = sbr.rel (%p308) target = $region48
        $region47: #{tpu_custom_call.1} parent=39 // pred_region
          %311 = dma.done %s304, 1024
        $region48: #{tpu_custom_call.1} parent=39 // pred_fallthru
          _
        %s312 = sand.u32 %s23, 1
        %s313 = scalar_lea.sflag [#allocation6], %s312
        %s314 = sand.u32 %s158, 1
        %s315 = smul.addr %s314, 64
        %s316 = scalar_lea.vmem [#allocation7], %s315
        // Predicated region
        $region49: #{tpu_custom_call.1} parent=39 // pred_check
          %p317 = pneg %p171
        $region50: #{tpu_custom_call.1} parent=39 // pred_check_branch
          %319 = sbr.rel (%p317) target = $region52
        $region51: #{tpu_custom_call.1} parent=39 // pred_region
          %320 = dma.done %s313, 1024
        $region52: #{tpu_custom_call.1} parent=39 // pred_fallthru
          _
        %p321 = pneg %p51
        %p322 = pneg %p48
        %s323 = sand.u32 %s23, 1
        %s324 = scalar_lea.sflag [#allocation6], %s323
        %s325 = sand.u32 %s68, 1
        %s326 = smul.addr %s325, 64
        %s327 = scalar_lea.vmem [#allocation5], %s326
        %p328 = pneg %p81
        %p329 = pneg %p78
        %s330 = smul.u32 %s27, 2
        %s331 = sadd.s32 %s330, %s28
        %p332 = scmp.lt.s32.totalorder %s331, 3
        %s333 = scalar_select %p332, %s331, 3
        %s334 = scalar_lea.vmem %s2, %s333
        %p335 = pneg %p111
        %p336 = pneg %p108
        %s337 = smul.u32 %s27, 2
        %s338 = sadd.s32 %s337, %s28
        %p339 = scmp.lt.s32.totalorder %s338, 3
        %s340 = scalar_select %p339, %s338, 3
        %s341 = scalar_lea.vmem %s3, %s340
        %p342 = pneg %p141
        %p343 = pneg %p138
        %s344 = sand.u32 %s23, 1
        %s345 = scalar_lea.sflag [#allocation6], %s344
        %s346 = sand.u32 %s158, 1
        %s347 = smul.addr %s346, 64
        %s348 = scalar_lea.vmem [#allocation7], %s347
        %p349 = pneg %p171
        %p350 = pneg %p168
        %p351 = pneg %p197
        %p352 = pneg %p194
        %s353 = sand.u32 %s184, 1
        %s354 = scalar_lea.sflag [#allocation4], %s353
        %s355 = sand.u32 %s184, 1
        %s356 = smul.addr %s355, 8
        %s357 = scalar_lea.vmem [#allocation8], %s356
        %s358 = smul.u32 %s27, 2
        %s359 = sadd.s32 %s358, %s28
        %s360 = smul.u32 %s27, 2
        %s361 = sadd.s32 %s360, %s28
        %p362 = scmp.lt.s32.totalorder %s361, 3
        %s363 = scalar_select %p362, %s361, 3
        %s364 = scalar_lea.vmem %s2, %s363
        %s365 = smul.u32 %s27, 2
        %s366 = sadd.s32 %s365, %s28
        %s367 = smul.u32 %s27, 2
        %s368 = sadd.s32 %s367, %s28
        %p369 = scmp.lt.s32.totalorder %s368, 3
        %s370 = scalar_select %p369, %s368, 3
        %s371 = scalar_lea.vmem %s3, %s370
        %s372 = smul.u32 %s27, 2
        %s373 = sadd.s32 %s372, %s28
        %s374 = smul.u32 %s27, 2
        %s375 = sadd.s32 %s374, %s28
        %s376 = smul.u32 16, %s375
        %p378 = scmp.eq.s32.totalorder %s28, 0
        // Predicated region
        $region53: #{tpu_custom_call.1} parent=39 // pred_check
          %p379 = pneg %p378
        $region54: #{tpu_custom_call.1} parent=39 // pred_check_branch
          %381 = sbr.rel (%p379) target = $region56
        $region55: #{tpu_custom_call.1} parent=39 // pred_region
          %382 = vst [vmem:[%s357] sm:$0xff] 0.0
        $region56: #{tpu_custom_call.1} parent=39 // pred_fallthru
          _
        %v383 = vld [vmem:[#allocation2] sm:$0xf]
        %v384 = vld [vmem:[%s307] sm:$0xf]
        %v385 = vld [vmem:[%s307 + $0x4] sm:$0xf]
        %v386 = vld [vmem:[%s307 + $0x8] sm:$0xf]
        %v387 = vld [vmem:[%s307 + $0xc] sm:$0xf]
        %v388 = vld [vmem:[%s307 + $0x10] sm:$0xf]
        %v389 = vld [vmem:[%s307 + $0x14] sm:$0xf]
        %v390 = vld [vmem:[%s307 + $0x18] sm:$0xf]
        %v391 = vld [vmem:[%s307 + $0x1c] sm:$0xf]
        %v392 = vld [vmem:[%s307 + $0x20] sm:$0xf]
        %v393 = vld [vmem:[%s307 + $0x24] sm:$0xf]
        %v394 = vld [vmem:[%s307 + $0x28] sm:$0xf]
        %v395 = vld [vmem:[%s307 + $0x2c] sm:$0xf]
        %v396 = vld [vmem:[%s307 + $0x30] sm:$0xf]
        %v397 = vld [vmem:[%s307 + $0x34] sm:$0xf]
        %v398 = vld [vmem:[%s307 + $0x38] sm:$0xf]
        %v399 = vld [vmem:[%s307 + $0x3c] sm:$0xf]
        %v416 = vunpack.c.l.b16 %v384
        %v417 = vunpack.c.l.b16 %v385
        %v418 = vunpack.c.l.b16 %v386
        %v419 = vunpack.c.l.b16 %v387
        %v420 = vunpack.c.l.b16 %v388
        %v421 = vunpack.c.l.b16 %v389
        %v422 = vunpack.c.l.b16 %v390
        %v423 = vunpack.c.l.b16 %v391
        %v424 = vunpack.c.l.b16 %v392
        %v425 = vunpack.c.l.b16 %v393
        %v426 = vunpack.c.l.b16 %v394
        %v427 = vunpack.c.l.b16 %v395
        %v428 = vunpack.c.l.b16 %v396
        %v429 = vunpack.c.l.b16 %v397
        %v430 = vunpack.c.l.b16 %v398
        %v431 = vunpack.c.l.b16 %v399
        %v432 = vpack.c.b16 %v417, %v416
        %v433 = vpack.c.b16 %v419, %v418
        %v434 = vpack.c.b16 %v421, %v420
        %v435 = vpack.c.b16 %v423, %v422
        %v436 = vpack.c.b16 %v425, %v424
        %v437 = vpack.c.b16 %v427, %v426
        %v438 = vpack.c.b16 %v429, %v428
        %v439 = vpack.c.b16 %v431, %v430
        %448 = vmatprep.subr.bf16.mxu0 0
        %449 = vmatpush1.bf16.msra.mxu0 %v432
        %450 = vmatprep.subr.bf16.mxu0 0
        %451 = vmatpush1.bf16.msra.mxu0 %v433
        %452 = vmatprep.subr.bf16.mxu0 0
        %453 = vmatpush1.bf16.msra.mxu0 %v434
        %454 = vmatprep.subr.bf16.mxu0 0
        %455 = vmatpush1.bf16.msra.mxu0 %v435
        %456 = vmatprep.subr.bf16.mxu0 0
        %457 = vmatpush1.bf16.msra.mxu0 %v436
        %458 = vmatprep.subr.bf16.mxu0 0
        %459 = vmatpush1.bf16.msra.mxu0 %v437
        %460 = vmatprep.subr.bf16.mxu0 0
        %461 = vmatpush1.bf16.msra.mxu0 %v438
        %462 = vmatprep.subr.bf16.mxu0 0
        %463 = vmatpush1.bf16.msra.mxu0 %v439
        %464 = vmatprep.subr.bf16.mxu0 0
        %465 = vmatpush1.bf16.msra.mxu0 0
        %466 = vmatprep.subr.bf16.mxu0 0
        %467 = vmatpush1.bf16.msra.mxu0 0
        %468 = vmatprep.subr.bf16.mxu0 0
        %469 = vmatpush1.bf16.msra.mxu0 0
        %470 = vmatprep.subr.bf16.mxu0 0
        %471 = vmatpush1.bf16.msra.mxu0 0
        %472 = vmatprep.subr.bf16.mxu0 0
        %473 = vmatpush1.bf16.msra.mxu0 0
        %474 = vmatprep.subr.bf16.mxu0 0
        %475 = vmatpush1.bf16.msra.mxu0 0
        %476 = vmatprep.subr.bf16.mxu0 0
        %477 = vmatpush1.bf16.msra.mxu0 0
        %478 = vmatprep.subr.bf16.mxu0 0
        %479 = vmatpush1.bf16.msra.mxu0 0
        %480 = vmatprep.mubr.bf16.mxu0 0
        %481 = vmatmul.mubr.bf16.gmra.mrb[0].mxu0 %v383
        %v482 = vpop.f32.mrb[0].mxu0
        %v483 = vadd.f32 0.0, %v482
        %v484 = vpop.f32.mrb[0].mxu0
        %v485 = vpop.f32.mrb[0].mxu0
        %v486 = vpop.f32.mrb[0].mxu0
        %487 = vdwg.mxu0
        %v488 = vrot.slane %v483, 4
        %v489 = vadd.f32 %v483, %v488
        %v490 = vrot.slane %v489, 2
        %v491 = vadd.f32 %v489, %v490
        %v492 = vrot.slane %v491, 1
        %v493 = vadd.f32 %v491, %v492
        %v494 = vrcp.pop 8.0
        %v495 = vmul.f32 %v493, %v494
        %v496 = vsub.f32 %v483, %v495
        %v497 = vmul.f32 %v496, %v496
        %v498 = vrot.slane %v497, 4
        %v499 = vadd.f32 %v497, %v498
        %v500 = vrot.slane %v499, 2
        %v501 = vadd.f32 %v499, %v500
        %v502 = vrot.slane %v501, 1
        %v503 = vadd.f32 %v501, %v502
        %v504 = vmul.f32 %v503, %v494
        %v505 = vadd.f32 %v504, 1e-05
        %v506 = vrsqrt.pop %v505
        %v507 = vld [vmem:[%s364] sm:$0x1]
        %v508 = vmul.f32 %v506, %v507
        %v509 = vlaneseq
        %v510 = vshrl.u32 %v509, 7
        %v511 = vsub.s32 0, %v510
        %v512 = vrot.slane %v508, %v511
        %v513 = vmul.f32 %v496, %v512
        %v514 = vld [vmem:[%s371] sm:$0x1]
        %v516 = vlaneseq
        %v517 = vshrl.u32 %v516, 7
        %v518 = vsub.s32 0, %v517
        %v519 = vrot.slane %v514, %v518
        %v521 = vadd.f32 %v513, %v519
        %v522 = vmax.f32 %v521, 0.0
        %v523 = vld [vmem:[%s357] sm:$0xff]
        %v524 = vpack.c.bf16 %v522, %v522
        %v525 = vld [vmem:[%s316] sm:$0xf]
        %v526 = vld [vmem:[%s316 + $0x4] sm:$0xf]
        %v527 = vld [vmem:[%s316 + $0x8] sm:$0xf]
        %v528 = vld [vmem:[%s316 + $0xc] sm:$0xf]
        %v529 = vld [vmem:[%s316 + $0x10] sm:$0xf]
        %v530 = vld [vmem:[%s316 + $0x14] sm:$0xf]
        %v531 = vld [vmem:[%s316 + $0x18] sm:$0xf]
        %v532 = vld [vmem:[%s316 + $0x1c] sm:$0xf]
        %v533 = vld [vmem:[%s316 + $0x20] sm:$0xf]
        %v534 = vld [vmem:[%s316 + $0x24] sm:$0xf]
        %v535 = vld [vmem:[%s316 + $0x28] sm:$0xf]
        %v536 = vld [vmem:[%s316 + $0x2c] sm:$0xf]
        %v537 = vld [vmem:[%s316 + $0x30] sm:$0xf]
        %v538 = vld [vmem:[%s316 + $0x34] sm:$0xf]
        %v539 = vld [vmem:[%s316 + $0x38] sm:$0xf]
        %v540 = vld [vmem:[%s316 + $0x3c] sm:$0xf]
        %v557 = vunpack.c.l.b16 %v525
        %v558 = vunpack.c.l.b16 %v526
        %v559 = vunpack.c.l.b16 %v527
        %v560 = vunpack.c.l.b16 %v528
        %v561 = vunpack.c.l.b16 %v529
        %v562 = vunpack.c.l.b16 %v530
        %v563 = vunpack.c.l.b16 %v531
        %v564 = vunpack.c.l.b16 %v532
        %v565 = vunpack.c.l.b16 %v533
        %v566 = vunpack.c.l.b16 %v534
        %v567 = vunpack.c.l.b16 %v535
        %v568 = vunpack.c.l.b16 %v536
        %v569 = vunpack.c.l.b16 %v537
        %v570 = vunpack.c.l.b16 %v538
        %v571 = vunpack.c.l.b16 %v539
        %v572 = vunpack.c.l.b16 %v540
        %v573 = vpack.c.b16 %v558, %v557
        %v574 = vpack.c.b16 %v560, %v559
        %v575 = vpack.c.b16 %v562, %v561
        %v576 = vpack.c.b16 %v564, %v563
        %v577 = vpack.c.b16 %v566, %v565
        %v578 = vpack.c.b16 %v568, %v567
        %v579 = vpack.c.b16 %v570, %v569
        %v580 = vpack.c.b16 %v572, %v571
        %589 = vmatprep.subr.bf16.mxu0 0
        %590 = vmatpush1.bf16.msra.mxu0 %v573
        %591 = vmatprep.subr.bf16.mxu0 0
        %592 = vmatpush1.bf16.msra.mxu0 %v574
        %593 = vmatprep.subr.bf16.mxu0 0
        %594 = vmatpush1.bf16.msra.mxu0 %v575
        %595 = vmatprep.subr.bf16.mxu0 0
        %596 = vmatpush1.bf16.msra.mxu0 %v576
        %597 = vmatprep.subr.bf16.mxu0 0
        %598 = vmatpush1.bf16.msra.mxu0 %v577
        %599 = vmatprep.subr.bf16.mxu0 0
        %600 = vmatpush1.bf16.msra.mxu0 %v578
        %601 = vmatprep.subr.bf16.mxu0 0
        %602 = vmatpush1.bf16.msra.mxu0 %v579
        %603 = vmatprep.subr.bf16.mxu0 0
        %604 = vmatpush1.bf16.msra.mxu0 %v580
        %605 = vmatprep.subr.bf16.mxu0 0
        %606 = vmatpush1.bf16.msra.mxu0 0
        %607 = vmatprep.subr.bf16.mxu0 0
        %608 = vmatpush1.bf16.msra.mxu0 0
        %609 = vmatprep.subr.bf16.mxu0 0
        %610 = vmatpush1.bf16.msra.mxu0 0
        %611 = vmatprep.subr.bf16.mxu0 0
        %612 = vmatpush1.bf16.msra.mxu0 0
        %613 = vmatprep.subr.bf16.mxu0 0
        %614 = vmatpush1.bf16.msra.mxu0 0
        %615 = vmatprep.subr.bf16.mxu0 0
        %616 = vmatpush1.bf16.msra.mxu0 0
        %617 = vmatprep.subr.bf16.mxu0 0
        %618 = vmatpush1.bf16.msra.mxu0 0
        %619 = vmatprep.subr.bf16.mxu0 0
        %620 = vmatpush1.bf16.msra.mxu0 0
        %621 = vmatprep.mubr.bf16.mxu0 0
        %622 = vmatmul.mubr.bf16.gmra.mrb[0].mxu0 %v524
        %v623 = vpop.f32.mrb[0].mxu0
        %v624 = vadd.f32 0.0, %v623
        %v625 = vpop.f32.mrb[0].mxu0
        %v626 = vpop.f32.mrb[0].mxu0
        %v627 = vpop.f32.mrb[0].mxu0
        %628 = vdwg.mxu0
        %v629 = vadd.f32 %v523, %v624
        %630 = vst [vmem:[%s357] sm:$0xff] %v629
        %s631 = sand.u32 %s184, 1
        %s632 = scalar_lea.sflag [#allocation4], %s631
        %s633 = sand.u32 %s184, 1
        %s634 = smul.addr %s633, 8
        %s635 = scalar_lea.vmem [#allocation8], %s634
        // Predicated region
        $region57: #{tpu_custom_call.1} parent=39 // pred_check
          %p636 = pneg %p194
        $region58: #{tpu_custom_call.1} parent=39 // pred_check_branch
          %638 = sbr.rel (%p636) target = $region60
        $region59: #{tpu_custom_call.1} parent=39 // pred_region
          %s640 = ssub.s32 128, 128
          %641 = vsyncadd %s632, %s640
          %s642 = smul.addr %s27, 128
          %s643 = scalar_lea.hbm %s5, %s642
          %s645 = sshll.u32 %s635, 4
          %s646 = int_to_ptr.vmem [resolvable:$true] %s645
          %648 = dma.vmem_to_hbm [thread:$0]  %s646, 128, %s643, %s632
        $region60: #{tpu_custom_call.1} parent=39 // pred_fallthru
          _
      $region40: #{tpu_custom_call.1} parent=5 // pred_fallthru
        _
      %p649 = scmp.le.s32.totalorder 2, %s18
      // Predicated region
      $region61: #{tpu_custom_call.1} parent=5 // pred_check
        %p650 = pneg %p649
      $region62: #{tpu_custom_call.1} parent=5 // pred_check_branch
        %652 = sbr.rel (%p650) target = $region64
      $region63: #{tpu_custom_call.1} parent=5 // pred_region
        %s653 = ssub.s32 %s18, 2
        // Predicated region
        $region65: #{tpu_custom_call.1} parent=63 // pred_check
          %p654 = pneg %p200
        $region66: #{tpu_custom_call.1} parent=63 // pred_check_branch
          %656 = sbr.rel (%p654) target = $region68
        $region67: #{tpu_custom_call.1} parent=63 // pred_region
          %s657 = sand.u32 %s185, 1
          %s658 = scalar_lea.sflag [#allocation4], %s657
          %s659 = sand.u32 %s185, 1
          %s660 = smul.addr %s659, 8
          %s661 = scalar_lea.vmem [#allocation8], %s660
          %662 = dma.done %s658, 128
        $region68: #{tpu_custom_call.1} parent=63 // pred_fallthru
          _
      $region64: #{tpu_custom_call.1} parent=5 // pred_fallthru
        _
    $region6: #{tpu_custom_call.1} parent=1 // loop_footer
      %s22 = sadd.s32 1, %s18
    $region7: #{tpu_custom_call.1} parent=1 // loop_footer_branch
      %17 = sbr.rel target = $region3
    $region8: #{tpu_custom_call.1} parent=1 // loop_exit
      _
    %663 = vsyncpa [#allocation3], 1
    %s664 = scalar_lea.sflag [#allocation3], 1
    %665 = vsyncpa %s664, 1
    %666 = vsyncpa [#allocation6], 1
    %s667 = scalar_lea.sflag [#allocation6], 1
    %668 = vsyncpa %s667, 1
    %669 = vsyncpa [#allocation4], 1
    %s670 = scalar_lea.sflag [#allocation4], 1
    %671 = vsyncpa %s670, 1

</llo_original>
